<compile_context>
chip_gen: v7x
topology: tpu7x:2x2x1
jax: 0.10.0
libtpu: 0.0.40
codegen_flags: <defaults>
</compile_context>

<pallas_src>
import math
from functools import partial

import jax
import jax.numpy as jnp
from jax.experimental import pallas as pl
from jax.experimental.pallas import tpu as pltpu


def _build_pe_table(d_model: int, max_len: int = 5000) -> jnp.ndarray:
    """Deterministic sinusoidal table, identical math to the torch __init__ (float32)."""
    position = jnp.arange(0, max_len, dtype=jnp.float32)[:, None]            # (max_len, 1)
    div_term = jnp.exp(
        jnp.arange(0, d_model, 2, dtype=jnp.float32) * (-math.log(10000.0) / d_model)
    )
    pe = jnp.zeros((max_len, d_model), dtype=jnp.float32)
    pe = pe.at[:, 0::2].set(jnp.sin(position * div_term))
    pe = pe.at[:, 1::2].set(jnp.cos(position * div_term)[:, : d_model // 2])  # safe for odd D
    return pe                                                                 # (max_len, D)


def _round_up(n: int, m: int) -> int:
    return ((n + m - 1) // m) * m


def _vmem_capacity_bytes() -> int:
    try:
        return int(pltpu.get_tpu_info().vmem_capacity_bytes)
    except Exception:
        return 64 * 1024 * 1024  # conservative (v7x-sized) fallback


def _sublane_granule(dtype) -> int:
    # 8 rows for 4-byte, 16 for 2-byte, 32 for 1-byte dtypes (native sublane packing).
    return max(8, 32 // max(1, jnp.dtype(dtype).itemsize))


def _pe_add_kernel(x_ref, pe_ref, o_ref, *, n_groups: int, n_batch: int, d: int,
                   wide_store: bool):
    """x_ref/o_ref: (TS, n_groups*n_batch*d); pe_ref: (TS, n_groups*d), float32.

    Lane layout of x/o rows is (group, batch, d); pe row layout is (group, d).
    Add is done in float32 (matches torch's promoted add), cast back on store.
    """
    if wide_store:
        # Small total width (<= 8 vregs): build one lane-dense pe row and do a single
        # full-width store (avoids masked vst.msk partial stores for D < 128).
        cols = []
        for g in range(n_groups):
            pe_g = pe_ref[:, g * d:(g + 1) * d].astype(jnp.float32)
            cols.extend([pe_g] * n_batch)
        pe_wide = cols[0] if len(cols) == 1 else jnp.concatenate(cols, axis=1)
        o_ref[...] = (x_ref[...].astype(jnp.float32) + pe_wide).astype(o_ref.dtype)
    else:
        # Per-batch static ref slices: no (TS, B*D) temporary, stores go straight to
        # o_ref and are lane-aligned whenever d is a multiple of 128.
        for g in range(n_groups):
            pe_g = pe_ref[:, g * d:(g + 1) * d].astype(jnp.float32)
            for b in range(n_batch):
                c0 = (g * n_batch + b) * d
                xb = x_ref[:, c0:c0 + d].astype(jnp.float32)
                o_ref[:, c0:c0 + d] = (xb + pe_g).astype(o_ref.dtype)


def positional_encoding_forward(x: jnp.ndarray, pe_table: jnp.ndarray,
                                *, donate_x: bool = False) -> jnp.ndarray:
    """x: (S, B, D); pe_table: (max_len, D) float32. Returns x + pe[:S] broadcast over B."""
    assert x.ndim == 3, "expected (seq_len, batch, d_model)"
    S, B, D = x.shape
    max_len = pe_table.shape[0]
    if S > max_len:
        raise ValueError(f"seq_len {S} exceeds positional-encoding max_len {max_len}")
    if pe_table.dtype != jnp.float32:
        pe_table = pe_table.astype(jnp.float32)  # builder already returns f32; no-op normally

    itemsize = jnp.dtype(x.dtype).itemsize
    granule = _sublane_granule(x.dtype)
    vmem = _vmem_capacity_bytes()
    budget = vmem // 4 if vmem <= 64 * 1024 * 1024 else vmem // 3  # explicit x2 below = dbl-buf

    # ---- Lane-density: fold G sequence rows into the lane dim when B*D < 128. ----
    lanes = B * D
    G = 1
    if lanes < 128:
        g_try = 128 // math.gcd(128, lanes)          # smallest G with G*lanes % 128 == 0
        if g_try <= S and S % g_try == 0 and g_try * lanes <= 1024:
            G = g_try
    rows = S // G

    if G == 1:
        x2 = x.reshape(S, B * D)                     # free reshape of contiguous trailing dims
        pe_in = pe_table                             # full table; BlockSpec windows S rows only
    else:
        x2 = x.reshape(rows, G * B * D)              # free reshape
        pe_in = pe_table[:S].reshape(rows, G * D)    # touches only S rows (tiny), stays f32

    # ---- Batch-group tiling (2nd grid axis) to keep huge B*D rows inside VMEM. ----
    def _tile_bytes(bg: int, ts: int) -> int:
        # double-buffered (x tile + out tile) in x.dtype + pe tile in f32
        return 2 * ts * (2 * G * bg * D * itemsize + G * D * 4)

    BG = B
    if G == 1 and B > 1:
        for cand in range(B, 0, -1):
            if B % cand:
                continue
            legal = (cand == B) or ((cand * D) % 128 == 0)   # keep lane blocks 128-aligned
            if legal and _tile_bytes(cand, granule) <= budget:
                BG = cand
                break
    nb = B // BG

    x_width = G * BG * D
    pe_width = G * D

    # ---- Sequence-tile sizing (dtype granule, VMEM budget, v7x megacore split). ----
    row_bytes = 2 * x_width * itemsize + pe_width * 4
    ts_fit = budget // (2 * row_bytes)                         # 2 = double buffering
    ts_fit = max(granule, (ts_fit // granule) * granule)
    ts_cap = _round_up(rows, granule)
    if rows >= 1024:                                           # ensure >=2 grid steps (v7x 2 TCs)
        ts_cap = min(ts_cap, _round_up((rows + 1) // 2, granule))
    TS = int(max(granule, min(ts_fit, 4096, ts_cap)))

    grid = (pl.cdiv(rows, TS), nb)

    # Wide (single lane-dense store) path only for small widths where D < 128 would
    # otherwise force masked per-slice stores.
    wide_store = (D % 128 != 0) and (x_width <= 1024)

    out2 = pl.pallas_call(
        partial(_pe_add_kernel, n_groups=G, n_batch=BG, d=D, wide_store=wide_store),
        out_shape=jax.ShapeDtypeStruct(x2.shape, x.dtype),
        grid=grid,
        in_specs=[
            pl.BlockSpec((TS, x_width), lambda i, j: (i, j)),   # x tile
            pl.BlockSpec((TS, pe_width), lambda i, j: (i, 0)),  # pe window (f32, S rows only)
        ],
        out_specs=pl.BlockSpec((TS, x_width), lambda i, j: (i, j)),
        compiler_params=pltpu.CompilerParams(
            dimension_semantics=("parallel", "parallel"),
            vmem_limit_bytes=int(min(vmem // 2, 64 * 1024 * 1024)),
        ),
        input_output_aliases={0: 0} if donate_x else {},
    )(x2, pe_in)

    return out2.reshape(S, B, D)


if __name__ == "__main__":
    d_model = 32
    seq_len = 16
    batch = 2
    max_len = 5000

    key = jax.random.PRNGKey(0)
    x = jax.random.normal(key, (seq_len, batch, d_model), dtype=jnp.float32)

    pe_table = _build_pe_table(d_model, max_len)   # built once, reused across calls

    out = positional_encoding_forward(x, pe_table)
    out = jax.block_until_ready(out)

    # Reference (pure JAX), matching torch's f32-promoted broadcast add.
    ref = (x.astype(jnp.float32) + pe_table[:seq_len][:, None, :]).astype(x.dtype)
    assert out.shape == x.shape and out.dtype == x.dtype
    assert jnp.allclose(out, ref, atol=1e-6, rtol=1e-6)

    print("KERNEL_OK")
</pallas_src>

<mosaic_0001>
module attributes {stable_mosaic.version = 11 : i64} {
  func.func @_pe_add_kernel(%arg0: i32, %arg1: i32, %arg2: memref<8x128xf32, #tpu.memory_space<vmem>>, %arg3: memref<8x64xf32, #tpu.memory_space<vmem>>, %arg4: memref<8x128xf32, #tpu.memory_space<vmem>>) attributes {dimension_semantics = [#tpu.dimension_semantics<parallel>, #tpu.dimension_semantics<parallel>], iteration_bounds = array<i64: 1, 1>, scalar_prefetch = 0 : i64, scratch_operands = 0 : i64, tpu.core_type = #tpu.core_type<tc>, window_params = [{transform_indices = @transform_0, window_bounds = array<i64: 8, 128>}, {transform_indices = @transform_1, window_bounds = array<i64: 8, 64>}, {transform_indices = @transform_2, window_bounds = array<i64: 8, 128>}]} {
    %c0 = arith.constant 0 : index
    %c0_0 = arith.constant 0 : index
    %0 = vector.load %arg3[%c0, %c0_0] : memref<8x64xf32, #tpu.memory_space<vmem>>, vector<8x32xf32>
    %c0_1 = arith.constant 0 : index
    %c32 = arith.constant 32 : index
    %1 = vector.load %arg3[%c0_1, %c32] : memref<8x64xf32, #tpu.memory_space<vmem>>, vector<8x32xf32>
    %2 = tpu.concatenate %0, %0, %1, %1 in 1 : vector<8x32xf32>, vector<8x32xf32>, vector<8x32xf32>, vector<8x32xf32> -> vector<8x128xf32>
    %c0_2 = arith.constant 0 : index
    %c0_3 = arith.constant 0 : index
    %3 = vector.load %arg2[%c0_2, %c0_3] : memref<8x128xf32, #tpu.memory_space<vmem>>, vector<8x128xf32>
    %4 = arith.addf %3, %2 : vector<8x128xf32>
    %c0_4 = arith.constant 0 : index
    %c0_5 = arith.constant 0 : index
    %5 = vector.load %arg4[%c0_4, %c0_5] : memref<8x128xf32, #tpu.memory_space<vmem>>, vector<8x128xf32>
    tpu.vector_store %arg4[%c0_4, %c0_5], %4 {strides = array<i32>} : memref<8x128xf32, #tpu.memory_space<vmem>>, vector<8x128xf32>,
    return
  }
  func.func @transform_0(%arg0: i32, %arg1: i32) -> (i32, i32) {
    %c0_i32 = arith.constant 0 : i32
    return %arg0, %arg1 : i32, i32
  }
  func.func @transform_1(%arg0: i32, %arg1: i32) -> (i32, i32) {
    %c0_i32 = arith.constant 0 : i32
    %c0_i32_0 = arith.constant 0 : i32
    return %arg0, %c0_i32 : i32, i32
  }
  func.func @transform_2(%arg0: i32, %arg1: i32) -> (i32, i32) {
    %c0_i32 = arith.constant 0 : i32
    return %arg0, %arg1 : i32, i32
  }
}

</mosaic_0001>

<llo_original>
// kernel: tpu_custom_call.1
$region0: #{tpu_custom_call.1}
  #allocation0 [shape = 'u32[]', space=smem, size = 0x4, offset = 0x4, fixed_abs, tag = 'smem constant byte address 0x4 - core index']
  #allocation1 [shape = 'u32[144,128]{1,0:T(1,128)}', space=vmem, size = 0x12000, scoped, tag = 'internal scratch']
  %s0 = inlined_call_operand.hbm [shape: f32[8,128], index: 0, kind: input, shape index: {}]
  %s1 = inlined_call_operand.hbm [shape: f32[8,64], index: 1, kind: input, shape index: {}]
  %s2 = inlined_call_operand.hbm [shape: f32[8,128], index: 2, kind: output, shape index: {}]
  %s3 = sld [smem:[#allocation0]]
  $region26: #{tpu_custom_call.1} parent=0
    _
  %s5 = ssub.s32 1, %s3
  %s6 = scalar_select 0, %s5, %s3
  $region1: #{tpu_custom_call.1} parent=0
    #allocation2 [shape = 'u8[4096]{0}', space=vmem, size = 0x1000, scoped, tag = 'input window, operand 0, single buffered']
    #allocation3 [shape = 's32[1]{0}', space=sflag, size = 0x4, scoped, tag = 'scoped memory for tpu_custom_call.1']
    #allocation4 [shape = 's32[1]{0}', space=sflag, size = 0x4, scoped, tag = 'scoped memory for tpu_custom_call.1']
    #allocation5 [shape = 'u8[4096]{0}', space=vmem, size = 0x1000, scoped, tag = 'input window, operand 1, single buffered']
    #allocation6 [shape = 's32[1]{0}', space=sflag, size = 0x4, scoped, tag = 'scoped memory for tpu_custom_call.1']
    #allocation7 [shape = 'u8[4096]{0}', space=vmem, size = 0x1000, scoped, tag = 'output window, operand 0, single buffered']
    %7 = vsyncpa [#allocation3], 0
    %8 = vsyncpa [#allocation6], 0
    %9 = vsyncpa [#allocation4], 0
    // Predicated region
    $region2: #{tpu_custom_call.1} parent=1 // pred_check
      _
    $region3: #{tpu_custom_call.1} parent=1 // pred_check_branch
      %11 = sbr.rel (0) target = $region5
    $region4: #{tpu_custom_call.1} parent=1 // pred_region
      %s13 = ssub.s32 128, 128
      %14 = vsyncadd [#allocation3], %s13
      %s16 = sshll.u32 [#allocation2], 4
      %s17 = int_to_ptr.vmem [resolvable:$true] %s16
      %19 = dma.hbm_to_vmem [thread:$0]  %s0, 128, %s17, [#allocation3]
    $region5: #{tpu_custom_call.1} parent=1 // pred_fallthru
      _
    // Predicated region
    $region6: #{tpu_custom_call.1} parent=1 // pred_check
      _
    $region7: #{tpu_custom_call.1} parent=1 // pred_check_branch
      %21 = sbr.rel (0) target = $region9
    $region8: #{tpu_custom_call.1} parent=1 // pred_region
      %s23 = ssub.s32 128, 128
      %24 = vsyncadd [#allocation6], %s23
      %s26 = sshll.u32 [#allocation5], 4
      %s27 = int_to_ptr.vmem [resolvable:$true] %s26
      %29 = dma.hbm_to_vmem [thread:$0]  %s1, 128, %s27, [#allocation6]
    $region9: #{tpu_custom_call.1} parent=1 // pred_fallthru
      _
    // Predicated region
    $region10: #{tpu_custom_call.1} parent=1 // pred_check
      _
    $region11: #{tpu_custom_call.1} parent=1 // pred_check_branch
      %31 = sbr.rel (0) target = $region13
    $region12: #{tpu_custom_call.1} parent=1 // pred_region
      %32 = dma.done [#allocation3], 128
    $region13: #{tpu_custom_call.1} parent=1 // pred_fallthru
      _
    // Predicated region
    $region14: #{tpu_custom_call.1} parent=1 // pred_check
      _
    $region15: #{tpu_custom_call.1} parent=1 // pred_check_branch
      %34 = sbr.rel (0) target = $region17
    $region16: #{tpu_custom_call.1} parent=1 // pred_region
      %35 = dma.done [#allocation6], 128
    $region17: #{tpu_custom_call.1} parent=1 // pred_fallthru
      _
    %v36 = vld [vmem:[#allocation5] sm:$0xff]
    %38 = vrot.lane.b32.xlu0 %v36, 32
    %v39 = vpop.permute.xlu0 %38
    %41 = vrot.lane.b32.xlu0 %v36, 64
    %v42 = vpop.permute.xlu0 %41
    %vm44 = vcmask 261120
    %v45 = vsel %vm44, %v36, %v39
    %vm46 = vcmask 523264
    %v47 = vsel %vm46, %v45, %v39
    %vm48 = vcmask 785408
    %v49 = vsel %vm48, %v47, %v42
    %v50 = vld [vmem:[#allocation2] sm:$0xff]
    %v51 = vadd.f32 %v50, %v49
    %52 = vst [vmem:[#allocation7] sm:$0xff] %v51
    // Predicated region
    $region18: #{tpu_custom_call.1} parent=1 // pred_check
      _
    $region19: #{tpu_custom_call.1} parent=1 // pred_check_branch
      %54 = sbr.rel (0) target = $region21
    $region20: #{tpu_custom_call.1} parent=1 // pred_region
      %s56 = ssub.s32 128, 128
      %57 = vsyncadd [#allocation4], %s56
      %s59 = sshll.u32 [#allocation7], 4
      %s60 = int_to_ptr.vmem [resolvable:$true] %s59
      %62 = dma.vmem_to_hbm [thread:$0]  %s60, 128, %s2, [#allocation4]
    $region21: #{tpu_custom_call.1} parent=1 // pred_fallthru
      _
    // Predicated region
    $region22: #{tpu_custom_call.1} parent=1 // pred_check
      _
    $region23: #{tpu_custom_call.1} parent=1 // pred_check_branch
      %64 = sbr.rel (0) target = $region25
    $region24: #{tpu_custom_call.1} parent=1 // pred_region
      %65 = dma.done [#allocation4], 128
    $region25: #{tpu_custom_call.1} parent=1 // pred_fallthru
      _
    %66 = vsyncpa [#allocation3], 1
    %67 = vsyncpa [#allocation6], 1
    %68 = vsyncpa [#allocation4], 1

</llo_original>
